<compile_context>
chip_gen: v6e
topology: v6e:2x2x1
jax: 0.10.0
libtpu: 0.0.40
codegen_flags: <defaults>
</compile_context>

<pallas_src>
import jax
import jax.numpy as jnp
from jax.experimental import pallas as pl
from jax.experimental.pallas import tpu as pltpu  # noqa: F401  (kept for completeness)

# ---- config (mirrors cfg / dataset used in BiResNet.__init__) ----
GLIMPSE = 2      # cfg.TRAIN.ATTENTION.GLIMPSE
HID_DIM = 32     # cfg.TRAIN.QUESTION.HID_DIM
V_DIM   = 8      # dataset.v_dim
B, V_OBJ, Q_LEN = 2, 16, 8   # batch, #visual objects, question length

# Lane-dense padded output tile (one full (8,128) f32 vreg >= (B, HID_DIM)).
OUT_SUB, OUT_LANE = 8, 128
assert B <= OUT_SUB, "output padding assumes B <= 8 (one vreg of sublanes)"
assert HID_DIM <= OUT_LANE, "output padding assumes HID_DIM <= 128 (one vreg of lanes)"


# ---- packed parameter buffer layout (all offsets sublane(8)-aligned) ----
def _align8(n):
    return -(-n // 8) * 8

ROWS_WV = _align8(V_DIM)      # 8
ROWS_WQ = _align8(HID_DIM)    # 32
ROWS_WP = _align8(HID_DIM)    # 32
ROWS_B  = 8                   # each bias gets its own 8-row block (row 0 valid)
OFF_WV = 0
OFF_WQ = OFF_WV + ROWS_WV     # 8
OFF_WP = OFF_WQ + ROWS_WQ     # 40
OFF_BV = OFF_WP + ROWS_WP     # 72
OFF_BQ = OFF_BV + ROWS_B      # 80
OFF_BP = OFF_BQ + ROWS_B      # 88
G_STRIDE = OFF_BP + ROWS_B    # 96 rows per glimpse
P_ROWS = GLIMPSE * G_STRIDE   # 192 rows total  (192 x 32 f32 = 24 KB -> one DMA)


def prepare_params(params):
    """One-time parameter packing (call at param-load time, NOT per forward)."""
    buf = jnp.zeros((P_ROWS, HID_DIM), jnp.float32)
    for g in range(GLIMPSE):
        base = g * G_STRIDE
        buf = buf.at[base + OFF_WV: base + OFF_WV + V_DIM].set(params["Wv"][g])
        buf = buf.at[base + OFF_WQ: base + OFF_WQ + HID_DIM].set(params["Wq"][g])
        buf = buf.at[base + OFF_WP: base + OFF_WP + HID_DIM].set(params["Wp"][g])
        buf = buf.at[base + OFF_BV].set(params["bv"][g, 0])
        buf = buf.at[base + OFF_BQ].set(params["bq"][g, 0])
        buf = buf.at[base + OFF_BP].set(params["bp"][g, 0])
    return buf


def biresnet_kernel(v_ref, q_ref, att_ref, p_ref, out_ref):
    """Single invocation (no grid); the GLIMPSE loop is unrolled at trace time."""
    v_flat = v_ref[...].reshape(B * V_OBJ, V_DIM)   # (32, 8)
    q = q_ref[...]                                  # (B, Q_LEN, HID)  residual stream
    att = att_ref[...]                              # (B, GLIMPSE, V_OBJ, Q_LEN)

    for g in range(GLIMPSE):                        # small compile-time constant
        base = g * G_STRIDE
        # Static, sublane-aligned slices of the single packed param buffer.
        wv = p_ref[base + OFF_WV: base + OFF_WV + V_DIM, :]     # (V_DIM, HID)
        wq = p_ref[base + OFF_WQ: base + OFF_WQ + HID_DIM, :]   # (HID, HID)
        wp = p_ref[base + OFF_WP: base + OFF_WP + HID_DIM, :]   # (HID, HID)
        bv = p_ref[base + OFF_BV: base + OFF_BV + 1, :]         # (1, HID)
        bq = p_ref[base + OFF_BQ: base + OFF_BQ + 1, :]         # (1, HID)
        bp = p_ref[base + OFF_BP: base + OFF_BP + 1, :]         # (1, HID)

        # BCNet.v_net: Linear + ReLU  (MXU, (32,8)@(8,32))
        v_p = jax.nn.relu(
            jnp.dot(v_flat, wv, preferred_element_type=jnp.float32) + bv
        ).reshape(B, V_OBJ, HID_DIM)

        # BCNet.q_net: Linear + ReLU  (MXU, (16,32)@(32,32)); depends on evolving q
        q_p = jax.nn.relu(
            jnp.dot(q.reshape(B * Q_LEN, HID_DIM), wq,
                    preferred_element_type=jnp.float32) + bq
        ).reshape(B, Q_LEN, HID_DIM)

        # BCNet.forward_with_weights bilinear pooling:
        #   b_emb[b,h] = sum_{i,j} att[b,g,i,j] * v_p[b,i,h] * q_p[b,j,h]
        # Contract V_OBJ first on the MXU (canonical batched matmul after a tiny
        # minor-dim XLU transpose), then one small sublane reduce over Q_LEN.
        w_t = jnp.swapaxes(att[:, g], 1, 2)                       # (B, Q_LEN, V_OBJ)
        s = jnp.einsum('bqv,bvh->bqh', w_t, v_p,
                       preferred_element_type=jnp.float32)        # (B, Q_LEN, HID)
        b_emb = jnp.sum(s * q_p, axis=1)                          # (B, HID)

        # q_prj[g] (Linear, no activation) + residual broadcast over Q_LEN
        proj = jnp.dot(b_emb, wp, preferred_element_type=jnp.float32) + bp
        q = q + proj[:, None, :]                                  # (B, Q_LEN, HID)

    # q_emb.sum(1): zero the lane-dense (8,128) tile once, then one corner store.
    res = jnp.sum(q, axis=1)                                      # (B, HID)
    out_ref[...] = jnp.zeros((OUT_SUB, OUT_LANE), jnp.float32)
    out_ref[:B, :HID_DIM] = res


def biresnet_forward(v_emb, q_emb, att_p, logits, packed_params):
    del logits  # only feeds a discarded .max(2) in the PyTorch forward

    # Single invocation, no grid: every operand fits comfortably in VMEM and is mapped
    # as one full block (4 input DMAs total). See module TODO for large-batch gridding.
    out_padded = pl.pallas_call(
        biresnet_kernel,
        out_shape=jax.ShapeDtypeStruct((OUT_SUB, OUT_LANE), jnp.float32),
    )(v_emb, q_emb, att_p, packed_params)

    return out_padded[:B, :HID_DIM]


def ref_forward(v_emb, q_emb, att_p, params):
    """Pure-JAX reference of the PyTorch forward (eval mode)."""
    q = q_emb
    for g in range(GLIMPSE):
        v_proj = jax.nn.relu(v_emb @ params["Wv"][g] + params["bv"][g])
        q_proj = jax.nn.relu(q @ params["Wq"][g] + params["bq"][g])
        s = jnp.einsum('bvq,bvh->bqh', att_p[:, g], v_proj)
        b_emb = jnp.sum(s * q_proj, axis=1)
        q = q + (b_emb @ params["Wp"][g] + params["bp"][g])[:, None, :]
    return q.sum(axis=1)


def init_params(key):
    ks = jax.random.split(key, 6)
    scale = 0.1
    return {
        "Wv": scale * jax.random.normal(ks[0], (GLIMPSE, V_DIM, HID_DIM), jnp.float32),
        "bv": scale * jax.random.normal(ks[1], (GLIMPSE, 1, HID_DIM), jnp.float32),
        "Wq": scale * jax.random.normal(ks[2], (GLIMPSE, HID_DIM, HID_DIM), jnp.float32),
        "bq": scale * jax.random.normal(ks[3], (GLIMPSE, 1, HID_DIM), jnp.float32),
        "Wp": scale * jax.random.normal(ks[4], (GLIMPSE, HID_DIM, HID_DIM), jnp.float32),
        "bp": scale * jax.random.normal(ks[5], (GLIMPSE, 1, HID_DIM), jnp.float32),
    }


if __name__ == "__main__":
    key = jax.random.PRNGKey(0)
    k_v, k_q, k_a, k_l, k_p = jax.random.split(key, 5)

    v_emb = jax.random.normal(k_v, (B, V_OBJ, V_DIM), jnp.float32)
    q_emb = jax.random.normal(k_q, (B, Q_LEN, HID_DIM), jnp.float32)
    att_p = jax.nn.softmax(
        jax.random.normal(k_a, (B, GLIMPSE, V_OBJ, Q_LEN), jnp.float32), axis=2)
    logits = jax.random.normal(k_l, (B, GLIMPSE, V_OBJ, Q_LEN), jnp.float32)
    params = init_params(k_p)

    # One-time parameter packing (outside the forward path).
    packed_params = jax.block_until_ready(prepare_params(params))

    out = biresnet_forward(v_emb, q_emb, att_p, logits, packed_params)
    out = jax.block_until_ready(out)

    expected = ref_forward(v_emb, q_emb, att_p, params)
    assert out.shape == (B, HID_DIM)
    assert jnp.allclose(out, expected, atol=1e-4, rtol=1e-4), "mismatch vs JAX reference"

    print("KERNEL_OK")
</pallas_src>

<mosaic_0001>
module attributes {stable_mosaic.version = 11 : i64} {
  func.func @biresnet_kernel(%arg0: memref<2x16x8xf32, #tpu.memory_space<vmem>>, %arg1: memref<2x8x32xf32, #tpu.memory_space<vmem>>, %arg2: memref<2x2x16x8xf32, #tpu.memory_space<vmem>>, %arg3: memref<192x32xf32, #tpu.memory_space<vmem>>, %arg4: memref<8x128xf32, #tpu.memory_space<vmem>>) attributes {dimension_semantics = [], scalar_prefetch = 0 : i64, scratch_operands = 0 : i64, tpu.core_type = #tpu.core_type<tc>} {
    %c0 = arith.constant 0 : index
    %c0_0 = arith.constant 0 : index
    %c0_1 = arith.constant 0 : index
    %0 = vector.load %arg0[%c0, %c0_0, %c0_1] : memref<2x16x8xf32, #tpu.memory_space<vmem>>, vector<2x16x8xf32>
    %1 = vector.shape_cast %0 : vector<2x16x8xf32> to vector<32x8xf32>
    %c0_2 = arith.constant 0 : index
    %c0_3 = arith.constant 0 : index
    %c0_4 = arith.constant 0 : index
    %2 = vector.load %arg1[%c0_2, %c0_3, %c0_4] : memref<2x8x32xf32, #tpu.memory_space<vmem>>, vector<2x8x32xf32>
    %c0_5 = arith.constant 0 : index
    %c0_6 = arith.constant 0 : index
    %c0_7 = arith.constant 0 : index
    %c0_8 = arith.constant 0 : index
    %3 = vector.load %arg2[%c0_5, %c0_6, %c0_7, %c0_8] : memref<2x2x16x8xf32, #tpu.memory_space<vmem>>, vector<2x2x16x8xf32>
    %c0_9 = arith.constant 0 : index
    %c0_10 = arith.constant 0 : index
    %4 = vector.load %arg3[%c0_9, %c0_10] : memref<192x32xf32, #tpu.memory_space<vmem>>, vector<8x32xf32>
    %c8 = arith.constant 8 : index
    %c0_11 = arith.constant 0 : index
    %5 = vector.load %arg3[%c8, %c0_11] : memref<192x32xf32, #tpu.memory_space<vmem>>, vector<32x32xf32>
    %c40 = arith.constant 40 : index
    %c0_12 = arith.constant 0 : index
    %6 = vector.load %arg3[%c40, %c0_12] : memref<192x32xf32, #tpu.memory_space<vmem>>, vector<32x32xf32>
    %c72 = arith.constant 72 : index
    %c0_13 = arith.constant 0 : index
    %7 = vector.load %arg3[%c72, %c0_13] : memref<192x32xf32, #tpu.memory_space<vmem>>, vector<1x32xf32>
    %c80 = arith.constant 80 : index
    %c0_14 = arith.constant 0 : index
    %8 = vector.load %arg3[%c80, %c0_14] : memref<192x32xf32, #tpu.memory_space<vmem>>, vector<1x32xf32>
    %c88 = arith.constant 88 : index
    %c0_15 = arith.constant 0 : index
    %9 = vector.load %arg3[%c88, %c0_15] : memref<192x32xf32, #tpu.memory_space<vmem>>, vector<1x32xf32>
    %cst = arith.constant dense<0.000000e+00> : vector<32x32xf32>
    %10 = tpu.matmul %1, %4, %cst {dimension_numbers = #tpu.dot_dimension_numbers<[1], [0], [0], [1], [0, 0, 1, 1], [], []>} : vector<32x8xf32>, vector<8x32xf32>, vector<32x32xf32> -> vector<32x32xf32>
    %11 = vector.broadcast %7 : vector<1x32xf32> to vector<32x32xf32>
    %12 = arith.addf %10, %11 : vector<32x32xf32>
    %cst_16 = arith.constant 0.000000e+00 : f32
    %13 = vector.broadcast %cst_16 : f32 to vector<32x32xf32>
    %14 = arith.maximumf %12, %13 : vector<32x32xf32>
    %15 = vector.shape_cast %14 : vector<32x32xf32> to vector<2x16x32xf32>
    %16 = vector.shape_cast %2 : vector<2x8x32xf32> to vector<16x32xf32>
    %cst_17 = arith.constant dense<0.000000e+00> : vector<16x32xf32>
    %17 = tpu.matmul %16, %5, %cst_17 {dimension_numbers = #tpu.dot_dimension_numbers<[1], [0], [0], [1], [0, 0, 1, 1], [], []>} : vector<16x32xf32>, vector<32x32xf32>, vector<16x32xf32> -> vector<16x32xf32>
    %18 = vector.broadcast %8 : vector<1x32xf32> to vector<16x32xf32>
    %19 = arith.addf %17, %18 : vector<16x32xf32>
    %cst_18 = arith.constant 0.000000e+00 : f32
    %20 = vector.broadcast %cst_18 : f32 to vector<16x32xf32>
    %21 = arith.maximumf %19, %20 : vector<16x32xf32>
    %22 = vector.shape_cast %21 : vector<16x32xf32> to vector<2x8x32xf32>
    %23 = vector.extract_strided_slice %3 {offsets = [0, 0, 0, 0], sizes = [2, 1, 16, 8], strides = [1, 1, 1, 1]} : vector<2x2x16x8xf32> to vector<2x1x16x8xf32>
    %24 = vector.shape_cast %23 : vector<2x1x16x8xf32> to vector<2x16x8xf32>
    %25 = tpu.transpose %24, [0, 2, 1] : vector<2x16x8xf32> -> vector<2x8x16xf32>
    "tpu.trace_start"() <{level = 10 : i32, message = "bqv,bvh->bqh"}> : () -> ()
    %cst_19 = arith.constant dense<0.000000e+00> : vector<2x8x32xf32>
    %26 = tpu.matmul %25, %15, %cst_19 {dimension_numbers = #tpu.dot_dimension_numbers<[2], [1], [1], [2], [0, 0, 0, 1, 1, 2], [0], [0]>} : vector<2x8x16xf32>, vector<2x16x32xf32>, vector<2x8x32xf32> -> vector<2x8x32xf32>
    "tpu.trace_stop"() : () -> ()
    %27 = arith.mulf %26, %22 : vector<2x8x32xf32>
    %cst_20 = arith.constant dense<0.000000e+00> : vector<2x32xf32>
    %28 = vector.multi_reduction <add>, %27, %cst_20 [1] : vector<2x8x32xf32> to vector<2x32xf32>
    %cst_21 = arith.constant dense<0.000000e+00> : vector<2x32xf32>
    %29 = tpu.matmul %28, %6, %cst_21 {dimension_numbers = #tpu.dot_dimension_numbers<[1], [0], [0], [1], [0, 0, 1, 1], [], []>} : vector<2x32xf32>, vector<32x32xf32>, vector<2x32xf32> -> vector<2x32xf32>
    %30 = vector.broadcast %9 : vector<1x32xf32> to vector<2x32xf32>
    %31 = arith.addf %29, %30 : vector<2x32xf32>
    %32 = vector.shape_cast %31 : vector<2x32xf32> to vector<2x1x32xf32>
    %33 = vector.broadcast %32 : vector<2x1x32xf32> to vector<2x8x32xf32>
    %34 = arith.addf %2, %33 : vector<2x8x32xf32>
    %c96 = arith.constant 96 : index
    %c0_22 = arith.constant 0 : index
    %35 = vector.load %arg3[%c96, %c0_22] : memref<192x32xf32, #tpu.memory_space<vmem>>, vector<8x32xf32>
    %c104 = arith.constant 104 : index
    %c0_23 = arith.constant 0 : index
    %36 = vector.load %arg3[%c104, %c0_23] : memref<192x32xf32, #tpu.memory_space<vmem>>, vector<32x32xf32>
    %c136 = arith.constant 136 : index
    %c0_24 = arith.constant 0 : index
    %37 = vector.load %arg3[%c136, %c0_24] : memref<192x32xf32, #tpu.memory_space<vmem>>, vector<32x32xf32>
    %c168 = arith.constant 168 : index
    %c0_25 = arith.constant 0 : index
    %38 = vector.load %arg3[%c168, %c0_25] : memref<192x32xf32, #tpu.memory_space<vmem>>, vector<1x32xf32>
    %c176 = arith.constant 176 : index
    %c0_26 = arith.constant 0 : index
    %39 = vector.load %arg3[%c176, %c0_26] : memref<192x32xf32, #tpu.memory_space<vmem>>, vector<1x32xf32>
    %c184 = arith.constant 184 : index
    %c0_27 = arith.constant 0 : index
    %40 = vector.load %arg3[%c184, %c0_27] : memref<192x32xf32, #tpu.memory_space<vmem>>, vector<1x32xf32>
    %cst_28 = arith.constant dense<0.000000e+00> : vector<32x32xf32>
    %41 = tpu.matmul %1, %35, %cst_28 {dimension_numbers = #tpu.dot_dimension_numbers<[1], [0], [0], [1], [0, 0, 1, 1], [], []>} : vector<32x8xf32>, vector<8x32xf32>, vector<32x32xf32> -> vector<32x32xf32>
    %42 = vector.broadcast %38 : vector<1x32xf32> to vector<32x32xf32>
    %43 = arith.addf %41, %42 : vector<32x32xf32>
    %cst_29 = arith.constant 0.000000e+00 : f32
    %44 = vector.broadcast %cst_29 : f32 to vector<32x32xf32>
    %45 = arith.maximumf %43, %44 : vector<32x32xf32>
    %46 = vector.shape_cast %45 : vector<32x32xf32> to vector<2x16x32xf32>
    %47 = vector.shape_cast %34 : vector<2x8x32xf32> to vector<16x32xf32>
    %cst_30 = arith.constant dense<0.000000e+00> : vector<16x32xf32>
    %48 = tpu.matmul %47, %36, %cst_30 {dimension_numbers = #tpu.dot_dimension_numbers<[1], [0], [0], [1], [0, 0, 1, 1], [], []>} : vector<16x32xf32>, vector<32x32xf32>, vector<16x32xf32> -> vector<16x32xf32>
    %49 = vector.broadcast %39 : vector<1x32xf32> to vector<16x32xf32>
    %50 = arith.addf %48, %49 : vector<16x32xf32>
    %cst_31 = arith.constant 0.000000e+00 : f32
    %51 = vector.broadcast %cst_31 : f32 to vector<16x32xf32>
    %52 = arith.maximumf %50, %51 : vector<16x32xf32>
    %53 = vector.shape_cast %52 : vector<16x32xf32> to vector<2x8x32xf32>
    %54 = vector.extract_strided_slice %3 {offsets = [0, 1, 0, 0], sizes = [2, 1, 16, 8], strides = [1, 1, 1, 1]} : vector<2x2x16x8xf32> to vector<2x1x16x8xf32>
    %55 = vector.shape_cast %54 : vector<2x1x16x8xf32> to vector<2x16x8xf32>
    %56 = tpu.transpose %55, [0, 2, 1] : vector<2x16x8xf32> -> vector<2x8x16xf32>
    "tpu.trace_start"() <{level = 10 : i32, message = "bqv,bvh->bqh"}> : () -> ()
    %cst_32 = arith.constant dense<0.000000e+00> : vector<2x8x32xf32>
    %57 = tpu.matmul %56, %46, %cst_32 {dimension_numbers = #tpu.dot_dimension_numbers<[2], [1], [1], [2], [0, 0, 0, 1, 1, 2], [0], [0]>} : vector<2x8x16xf32>, vector<2x16x32xf32>, vector<2x8x32xf32> -> vector<2x8x32xf32>
    "tpu.trace_stop"() : () -> ()
    %58 = arith.mulf %57, %53 : vector<2x8x32xf32>
    %cst_33 = arith.constant dense<0.000000e+00> : vector<2x32xf32>
    %59 = vector.multi_reduction <add>, %58, %cst_33 [1] : vector<2x8x32xf32> to vector<2x32xf32>
    %cst_34 = arith.constant dense<0.000000e+00> : vector<2x32xf32>
    %60 = tpu.matmul %59, %37, %cst_34 {dimension_numbers = #tpu.dot_dimension_numbers<[1], [0], [0], [1], [0, 0, 1, 1], [], []>} : vector<2x32xf32>, vector<32x32xf32>, vector<2x32xf32> -> vector<2x32xf32>
    %61 = vector.broadcast %40 : vector<1x32xf32> to vector<2x32xf32>
    %62 = arith.addf %60, %61 : vector<2x32xf32>
    %63 = vector.shape_cast %62 : vector<2x32xf32> to vector<2x1x32xf32>
    %64 = vector.broadcast %63 : vector<2x1x32xf32> to vector<2x8x32xf32>
    %65 = arith.addf %34, %64 : vector<2x8x32xf32>
    %cst_35 = arith.constant dense<0.000000e+00> : vector<2x32xf32>
    %66 = vector.multi_reduction <add>, %65, %cst_35 [1] : vector<2x8x32xf32> to vector<2x32xf32>
    %cst_36 = arith.constant 0.000000e+00 : f32
    %67 = vector.broadcast %cst_36 : f32 to vector<8x128xf32>
    %c0_37 = arith.constant 0 : index
    %c0_38 = arith.constant 0 : index
    %68 = vector.load %arg4[%c0_37, %c0_38] : memref<8x128xf32, #tpu.memory_space<vmem>>, vector<8x128xf32>
    tpu.vector_store %arg4[%c0_37, %c0_38], %67 {strides = array<i32>} : memref<8x128xf32, #tpu.memory_space<vmem>>, vector<8x128xf32>,
    %c0_39 = arith.constant 0 : index
    %c0_40 = arith.constant 0 : index
    %69 = vector.load %arg4[%c0_39, %c0_40] : memref<8x128xf32, #tpu.memory_space<vmem>>, vector<2x32xf32>
    tpu.vector_store %arg4[%c0_39, %c0_40], %66 {strides = array<i32>} : memref<8x128xf32, #tpu.memory_space<vmem>>, vector<2x32xf32>,
    return
  }
}

</mosaic_0001>

<llo_original>
// kernel: tpu_custom_call.1
$region0: #{tpu_custom_call.1}
  #allocation0 [shape = 'u32[]', space=smem, size = 0x4, offset = 0x4, fixed_abs, tag = 'smem constant byte address 0x4 - core index']
  #allocation1 [shape = 'u32[144,128]{1,0:T(1,128)}', space=vmem, size = 0x12000, scoped, tag = 'internal scratch']
  %s0 = inlined_call_operand.vmem [shape: f32[2,16,8], index: 0, kind: input, shape index: {}]
  %s1 = inlined_call_operand.vmem [shape: f32[2,8,32], index: 1, kind: input, shape index: {}]
  %s2 = inlined_call_operand.vmem [shape: f32[2,2,16,8], index: 2, kind: input, shape index: {}]
  %s3 = inlined_call_operand.vmem [shape: f32[192,32], index: 3, kind: input, shape index: {}]
  %s4 = inlined_call_operand.hbm [shape: f32[8,128], index: 4, kind: output, shape index: {}]
  %s5 = sld [smem:[#allocation0]]
  $region26: #{tpu_custom_call.1} parent=0
    _
  %s7 = ssub.s32 1, %s5
  %s8 = scalar_select 0, %s7, %s5
  $region1: #{tpu_custom_call.1} parent=0
    #allocation2 [shape = 'u8[4096]{0}', space=vmem, size = 0x1000, scoped, tag = 'output window, operand 0, single buffered']
    #allocation3 [shape = 's32[1]{0}', space=sflag, size = 0x4, scoped, tag = 'scoped memory for tpu_custom_call.1']
    %9 = vsyncpa [#allocation3], 0
    // Predicated region
    $region2: #{tpu_custom_call.1} parent=1 // pred_check
      _
    $region3: #{tpu_custom_call.1} parent=1 // pred_check_branch
      %11 = sbr.rel (0) target = $region5
    $region4: #{tpu_custom_call.1} parent=1 // pred_region
      _
    $region5: #{tpu_custom_call.1} parent=1 // pred_fallthru
      _
    // Predicated region
    $region6: #{tpu_custom_call.1} parent=1 // pred_check
      _
    $region7: #{tpu_custom_call.1} parent=1 // pred_check_branch
      %13 = sbr.rel (0) target = $region9
    $region8: #{tpu_custom_call.1} parent=1 // pred_region
      _
    $region9: #{tpu_custom_call.1} parent=1 // pred_fallthru
      _
    // Predicated region
    $region10: #{tpu_custom_call.1} parent=1 // pred_check
      _
    $region11: #{tpu_custom_call.1} parent=1 // pred_check_branch
      %15 = sbr.rel (0) target = $region13
    $region12: #{tpu_custom_call.1} parent=1 // pred_region
      _
    $region13: #{tpu_custom_call.1} parent=1 // pred_fallthru
      _
    // Predicated region
    $region14: #{tpu_custom_call.1} parent=1 // pred_check
      _
    $region15: #{tpu_custom_call.1} parent=1 // pred_check_branch
      %17 = sbr.rel (0) target = $region17
    $region16: #{tpu_custom_call.1} parent=1 // pred_region
      _
    $region17: #{tpu_custom_call.1} parent=1 // pred_fallthru
      _
    %v18 = vld [vmem:[%s0] sm:$0xff]
    %v19 = vld [vmem:[%s0 + $0x8] sm:$0xff]
    %v20 = vld [vmem:[%s0 + $0x10] sm:$0xff]
    %v21 = vld [vmem:[%s0 + $0x18] sm:$0xff]
    %v22 = vld [vmem:[%s1] sm:$0xff]
    %v23 = vld [vmem:[%s1 + $0x8] sm:$0xff]
    %v24 = vld [vmem:[%s2] sm:$0xff]
    %v25 = vld [vmem:[%s2 + $0x8] sm:$0xff]
    %v26 = vld [vmem:[%s2 + $0x10] sm:$0xff]
    %v27 = vld [vmem:[%s2 + $0x18] sm:$0xff]
    %v28 = vld [vmem:[%s2 + $0x20] sm:$0xff]
    %v29 = vld [vmem:[%s2 + $0x28] sm:$0xff]
    %v30 = vld [vmem:[%s2 + $0x30] sm:$0xff]
    %v31 = vld [vmem:[%s2 + $0x38] sm:$0xff]
    %v32 = vld [vmem:[%s3] sm:$0xff]
    %v33 = vld [vmem:[%s3 + $0x8] sm:$0xff]
    %v34 = vld [vmem:[%s3 + $0x10] sm:$0xff]
    %v35 = vld [vmem:[%s3 + $0x18] sm:$0xff]
    %v36 = vld [vmem:[%s3 + $0x20] sm:$0xff]
    %v37 = vld [vmem:[%s3 + $0x28] sm:$0xff]
    %v38 = vld [vmem:[%s3 + $0x30] sm:$0xff]
    %v39 = vld [vmem:[%s3 + $0x38] sm:$0xff]
    %v40 = vld [vmem:[%s3 + $0x40] sm:$0xff]
    %v41 = vld [vmem:[%s3 + $0x48] sm:$0x1]
    %v42 = vld [vmem:[%s3 + $0x50] sm:$0x1]
    %v43 = vld [vmem:[%s3 + $0x58] sm:$0x1]
    %v44 = vlaneseq
    %v45 = vshrl.u32 %v44, 7
    %v46 = vsub.s32 0, %v45
    %v47 = vrot.slane %v41, %v46
    %vm48 = vcmask 64512
    %v50 = vsel %vm48, %v18, 0
    %v53 = vsel %vm48, %v19, 0
    %v56 = vsel %vm48, %v20, 0
    %v59 = vsel %vm48, %v21, 0
    %61 = vmatprep.subr.mxu0 0.0
    %62 = vmatpush1.msra.mxu0 0.0
    %63 = vmatprep.subr.mxu0 0.0
    %64 = vmatpush1.msra.mxu0 0.0
    %65 = vmatprep.subr.mxu0 0.0
    %66 = vmatpush1.msra.mxu0 0.0
    %67 = vmatprep.subr.mxu0 0.0
    %68 = vmatpush1.msra.mxu0 0.0
    %69 = vmatprep.subr.mxu0 0.0
    %70 = vmatpush1.msra.mxu0 0.0
    %71 = vmatprep.subr.mxu0 0.0
    %72 = vmatpush1.msra.mxu0 0.0
    %73 = vmatprep.subr.mxu0 0.0
    %74 = vmatpush1.msra.mxu0 0.0
    %75 = vmatprep.subr.mxu0 0.0
    %76 = vmatpush1.msra.mxu0 0.0
    %77 = vmatprep.subr.mxu0 0.0
    %78 = vmatpush1.msra.mxu0 0.0
    %79 = vmatprep.subr.mxu0 0.0
    %80 = vmatpush1.msra.mxu0 0.0
    %81 = vmatprep.subr.mxu0 0.0
    %82 = vmatpush1.msra.mxu0 0.0
    %83 = vmatprep.subr.mxu0 0.0
    %84 = vmatpush1.msra.mxu0 0.0
    %85 = vmatprep.subr.mxu0 0.0
    %86 = vmatpush1.msra.mxu0 0.0
    %87 = vmatprep.subr.mxu0 0.0
    %88 = vmatpush1.msra.mxu0 0.0
    %89 = vmatprep.subr.mxu0 0.0
    %90 = vmatpush1.msra.mxu0 0.0
    %91 = vmatprep.subr.mxu0 0.0
    %92 = vmatpush1.msra.mxu0 %v32
    %93 = vmatprep.subr.mxu0 0.0
    %94 = vmatpush2.msra.mxu0 0.0
    %95 = vmatprep.subr.mxu0 0.0
    %96 = vmatpush2.msra.mxu0 0.0
    %97 = vmatprep.subr.mxu0 0.0
    %98 = vmatpush2.msra.mxu0 0.0
    %99 = vmatprep.subr.mxu0 0.0
    %100 = vmatpush2.msra.mxu0 0.0
    %101 = vmatprep.subr.mxu0 0.0
    %102 = vmatpush2.msra.mxu0 0.0
    %103 = vmatprep.subr.mxu0 0.0
    %104 = vmatpush2.msra.mxu0 0.0
    %105 = vmatprep.subr.mxu0 0.0
    %106 = vmatpush2.msra.mxu0 0.0
    %107 = vmatprep.subr.mxu0 0.0
    %108 = vmatpush2.msra.mxu0 0.0
    %109 = vmatprep.subr.mxu0 0.0
    %110 = vmatpush2.msra.mxu0 0.0
    %111 = vmatprep.subr.mxu0 0.0
    %112 = vmatpush2.msra.mxu0 0.0
    %113 = vmatprep.subr.mxu0 0.0
    %114 = vmatpush2.msra.mxu0 0.0
    %115 = vmatprep.subr.mxu0 0.0
    %116 = vmatpush2.msra.mxu0 0.0
    %117 = vmatprep.subr.mxu0 0.0
    %118 = vmatpush2.msra.mxu0 0.0
    %119 = vmatprep.subr.mxu0 0.0
    %120 = vmatpush2.msra.mxu0 0.0
    %121 = vmatprep.subr.mxu0 0.0
    %122 = vmatpush2.msra.mxu0 0.0
    %123 = vmatprep.subr.mxu0 0.0
    %124 = vmatpush2.msra.mxu0 0.0
    %125 = vmatprep.mubr.f32.mxu0 0.0
    %126 = vmatmul.mubr.f32.gmra.mxu0 %v50
    %v127 = vpop.f32.mrf.mxu0
    %v128 = vadd.f32 %v47, %v127
    %v129 = vpop.f32.mrf.mxu0
    %130 = vmatprep.mubr.f32.mxu0 0.0
    %131 = vmatmul.mubr.f32.gmra.mxu0 %v53
    %v132 = vpop.f32.mrf.mxu0
    %v133 = vadd.f32 %v47, %v132
    %v134 = vpop.f32.mrf.mxu0
    %135 = vmatprep.mubr.f32.mxu0 0.0
    %136 = vmatmul.mubr.f32.gmra.mxu0 %v56
    %v137 = vpop.f32.mrf.mxu0
    %v138 = vadd.f32 %v47, %v137
    %v139 = vpop.f32.mrf.mxu0
    %140 = vmatprep.mubr.f32.mxu0 0.0
    %141 = vmatmul.mubr.f32.gmra.mxu0 %v59
    %v142 = vpop.f32.mrf.mxu0
    %v143 = vadd.f32 %v47, %v142
    %v144 = vpop.f32.mrf.mxu0
    %145 = vdwg.mxu0
    %v146 = vmax.f32 %v128, 0.0
    %v147 = vmax.f32 %v133, 0.0
    %v148 = vmax.f32 %v138, 0.0
    %v149 = vmax.f32 %v143, 0.0
    %v150 = vlaneseq
    %v151 = vshrl.u32 %v150, 7
    %v152 = vsub.s32 0, %v151
    %v153 = vrot.slane %v42, %v152
    %vm154 = vcmask 261120
    %v156 = vsel %vm154, %v22, 0
    %v159 = vsel %vm154, %v23, 0
    %161 = vmatprep.subr.mxu0 0.0
    %162 = vmatpush1.msra.mxu0 0.0
    %163 = vmatprep.subr.mxu0 0.0
    %164 = vmatpush1.msra.mxu0 0.0
    %165 = vmatprep.subr.mxu0 0.0
    %166 = vmatpush1.msra.mxu0 0.0
    %167 = vmatprep.subr.mxu0 0.0
    %168 = vmatpush1.msra.mxu0 0.0
    %169 = vmatprep.subr.mxu0 0.0
    %170 = vmatpush1.msra.mxu0 0.0
    %171 = vmatprep.subr.mxu0 0.0
    %172 = vmatpush1.msra.mxu0 0.0
    %173 = vmatprep.subr.mxu0 0.0
    %174 = vmatpush1.msra.mxu0 0.0
    %175 = vmatprep.subr.mxu0 0.0
    %176 = vmatpush1.msra.mxu0 0.0
    %177 = vmatprep.subr.mxu0 0.0
    %178 = vmatpush1.msra.mxu0 0.0
    %179 = vmatprep.subr.mxu0 0.0
    %180 = vmatpush1.msra.mxu0 0.0
    %181 = vmatprep.subr.mxu0 0.0
    %182 = vmatpush1.msra.mxu0 0.0
    %183 = vmatprep.subr.mxu0 0.0
    %184 = vmatpush1.msra.mxu0 0.0
    %185 = vmatprep.subr.mxu0 0.0
    %186 = vmatpush1.msra.mxu0 %v36
    %187 = vmatprep.subr.mxu0 0.0
    %188 = vmatpush1.msra.mxu0 %v35
    %189 = vmatprep.subr.mxu0 0.0
    %190 = vmatpush1.msra.mxu0 %v34
    %191 = vmatprep.subr.mxu0 0.0
    %192 = vmatpush1.msra.mxu0 %v33
    %193 = vmatprep.subr.mxu0 0.0
    %194 = vmatpush2.msra.mxu0 0.0
    %195 = vmatprep.subr.mxu0 0.0
    %196 = vmatpush2.msra.mxu0 0.0
    %197 = vmatprep.subr.mxu0 0.0
    %198 = vmatpush2.msra.mxu0 0.0
    %199 = vmatprep.subr.mxu0 0.0
    %200 = vmatpush2.msra.mxu0 0.0
    %201 = vmatprep.subr.mxu0 0.0
    %202 = vmatpush2.msra.mxu0 0.0
    %203 = vmatprep.subr.mxu0 0.0
    %204 = vmatpush2.msra.mxu0 0.0
    %205 = vmatprep.subr.mxu0 0.0
    %206 = vmatpush2.msra.mxu0 0.0
    %207 = vmatprep.subr.mxu0 0.0
    %208 = vmatpush2.msra.mxu0 0.0
    %209 = vmatprep.subr.mxu0 0.0
    %210 = vmatpush2.msra.mxu0 0.0
    %211 = vmatprep.subr.mxu0 0.0
    %212 = vmatpush2.msra.mxu0 0.0
    %213 = vmatprep.subr.mxu0 0.0
    %214 = vmatpush2.msra.mxu0 0.0
    %215 = vmatprep.subr.mxu0 0.0
    %216 = vmatpush2.msra.mxu0 0.0
    %217 = vmatprep.subr.mxu0 0.0
    %218 = vmatpush2.msra.mxu0 0.0
    %219 = vmatprep.subr.mxu0 0.0
    %220 = vmatpush2.msra.mxu0 0.0
    %221 = vmatprep.subr.mxu0 0.0
    %222 = vmatpush2.msra.mxu0 0.0
    %223 = vmatprep.subr.mxu0 0.0
    %224 = vmatpush2.msra.mxu0 0.0
    %225 = vmatprep.mubr.f32.mxu0 0.0
    %226 = vmatmul.mubr.f32.gmra.mxu0 %v156
    %v227 = vpop.f32.mrf.mxu0
    %v228 = vadd.f32 %v153, %v227
    %v229 = vpop.f32.mrf.mxu0
    %230 = vmatprep.mubr.f32.mxu0 0.0
    %231 = vmatmul.mubr.f32.gmra.mxu0 %v159
    %v232 = vpop.f32.mrf.mxu0
    %v233 = vadd.f32 %v153, %v232
    %v234 = vpop.f32.mrf.mxu0
    %235 = vdwg.mxu0
    %v236 = vmax.f32 %v228, 0.0
    %v237 = vmax.f32 %v233, 0.0
    %238 = vxpose.xlu0.b32.start [1/16] %v24, 128
    %239 = vxpose.xlu0.b32.cont [2/16] %v25, 128
    %240 = vxpose.xlu0.b32.cont [3/16] 0.0, 128
    %241 = vxpose.xlu0.b32.cont [4/16] 0.0, 128
    %242 = vxpose.xlu0.b32.cont [5/16] 0.0, 128
    %243 = vxpose.xlu0.b32.cont [6/16] 0.0, 128
    %244 = vxpose.xlu0.b32.cont [7/16] 0.0, 128
    %245 = vxpose.xlu0.b32.cont [8/16] 0.0, 128
    %246 = vxpose.xlu0.b32.cont [9/16] 0.0, 128
    %247 = vxpose.xlu0.b32.cont [10/16] 0.0, 128
    %248 = vxpose.xlu0.b32.cont [11/16] 0.0, 128
    %249 = vxpose.xlu0.b32.cont [12/16] 0.0, 128
    %250 = vxpose.xlu0.b32.cont [13/16] 0.0, 128
    %251 = vxpose.xlu0.b32.cont [14/16] 0.0, 128
    %252 = vxpose.xlu0.b32.cont [15/16] 0.0, 128
    %253 = vxpose.xlu0.b32.end [16/16] 0.0, 128
    %v254 = vpop.trf.xlu0
    %v255 = vpop.trf.xlu0
    %v256 = vpop.trf.xlu0
    %v257 = vpop.trf.xlu0
    %v258 = vpop.trf.xlu0
    %v259 = vpop.trf.xlu0
    %v260 = vpop.trf.xlu0
    %v261 = vpop.trf.xlu0
    %v262 = vpop.trf.xlu0
    %v263 = vpop.trf.xlu0
    %v264 = vpop.trf.xlu0
    %v265 = vpop.trf.xlu0
    %v266 = vpop.trf.xlu0
    %v267 = vpop.trf.xlu0
    %v268 = vpop.trf.xlu0
    %v269 = vpop.trf.xlu0
    %270 = vxpose.xlu0.b32.start [1/16] %v28, 128
    %271 = vxpose.xlu0.b32.cont [2/16] %v29, 128
    %272 = vxpose.xlu0.b32.cont [3/16] 0.0, 128
    %273 = vxpose.xlu0.b32.cont [4/16] 0.0, 128
    %274 = vxpose.xlu0.b32.cont [5/16] 0.0, 128
    %275 = vxpose.xlu0.b32.cont [6/16] 0.0, 128
    %276 = vxpose.xlu0.b32.cont [7/16] 0.0, 128
    %277 = vxpose.xlu0.b32.cont [8/16] 0.0, 128
    %278 = vxpose.xlu0.b32.cont [9/16] 0.0, 128
    %279 = vxpose.xlu0.b32.cont [10/16] 0.0, 128
    %280 = vxpose.xlu0.b32.cont [11/16] 0.0, 128
    %281 = vxpose.xlu0.b32.cont [12/16] 0.0, 128
    %282 = vxpose.xlu0.b32.cont [13/16] 0.0, 128
    %283 = vxpose.xlu0.b32.cont [14/16] 0.0, 128
    %284 = vxpose.xlu0.b32.cont [15/16] 0.0, 128
    %285 = vxpose.xlu0.b32.end [16/16] 0.0, 128
    %v286 = vpop.trf.xlu0
    %v287 = vpop.trf.xlu0
    %v288 = vpop.trf.xlu0
    %v289 = vpop.trf.xlu0
    %v290 = vpop.trf.xlu0
    %v291 = vpop.trf.xlu0
    %v292 = vpop.trf.xlu0
    %v293 = vpop.trf.xlu0
    %v294 = vpop.trf.xlu0
    %v295 = vpop.trf.xlu0
    %v296 = vpop.trf.xlu0
    %v297 = vpop.trf.xlu0
    %v298 = vpop.trf.xlu0
    %v299 = vpop.trf.xlu0
    %v300 = vpop.trf.xlu0
    %v301 = vpop.trf.xlu0
    %vm302 = vcmask 130048
    %v304 = vsel %vm302, %v254, 0
    %306 = vmatprep.subr.mxu0 0.0
    %307 = vmatpush1.msra.mxu0 0.0
    %308 = vmatprep.subr.mxu0 0.0
    %309 = vmatpush1.msra.mxu0 0.0
    %310 = vmatprep.subr.mxu0 0.0
    %311 = vmatpush1.msra.mxu0 0.0
    %312 = vmatprep.subr.mxu0 0.0
    %313 = vmatpush1.msra.mxu0 0.0
    %314 = vmatprep.subr.mxu0 0.0
    %315 = vmatpush1.msra.mxu0 0.0
    %316 = vmatprep.subr.mxu0 0.0
    %317 = vmatpush1.msra.mxu0 0.0
    %318 = vmatprep.subr.mxu0 0.0
    %319 = vmatpush1.msra.mxu0 0.0
    %320 = vmatprep.subr.mxu0 0.0
    %321 = vmatpush1.msra.mxu0 0.0
    %322 = vmatprep.subr.mxu0 0.0
    %323 = vmatpush1.msra.mxu0 0.0
    %324 = vmatprep.subr.mxu0 0.0
    %325 = vmatpush1.msra.mxu0 0.0
    %326 = vmatprep.subr.mxu0 0.0
    %327 = vmatpush1.msra.mxu0 0.0
    %328 = vmatprep.subr.mxu0 0.0
    %329 = vmatpush1.msra.mxu0 0.0
    %330 = vmatprep.subr.mxu0 0.0
    %331 = vmatpush1.msra.mxu0 0.0
    %332 = vmatprep.subr.mxu0 0.0
    %333 = vmatpush1.msra.mxu0 0.0
    %334 = vmatprep.subr.mxu0 0.0
    %335 = vmatpush1.msra.mxu0 %v147
    %336 = vmatprep.subr.mxu0 0.0
    %337 = vmatpush1.msra.mxu0 %v146
    %338 = vmatprep.subr.mxu0 0.0
    %339 = vmatpush2.msra.mxu0 0.0
    %340 = vmatprep.subr.mxu0 0.0
    %341 = vmatpush2.msra.mxu0 0.0
    %342 = vmatprep.subr.mxu0 0.0
    %343 = vmatpush2.msra.mxu0 0.0
    %344 = vmatprep.subr.mxu0 0.0
    %345 = vmatpush2.msra.mxu0 0.0
    %346 = vmatprep.subr.mxu0 0.0
    %347 = vmatpush2.msra.mxu0 0.0
    %348 = vmatprep.subr.mxu0 0.0
    %349 = vmatpush2.msra.mxu0 0.0
    %350 = vmatprep.subr.mxu0 0.0
    %351 = vmatpush2.msra.mxu0 0.0
    %352 = vmatprep.subr.mxu0 0.0
    %353 = vmatpush2.msra.mxu0 0.0
    %354 = vmatprep.subr.mxu0 0.0
    %355 = vmatpush2.msra.mxu0 0.0
    %356 = vmatprep.subr.mxu0 0.0
    %357 = vmatpush2.msra.mxu0 0.0
    %358 = vmatprep.subr.mxu0 0.0
    %359 = vmatpush2.msra.mxu0 0.0
    %360 = vmatprep.subr.mxu0 0.0
    %361 = vmatpush2.msra.mxu0 0.0
    %362 = vmatprep.subr.mxu0 0.0
    %363 = vmatpush2.msra.mxu0 0.0
    %364 = vmatprep.subr.mxu0 0.0
    %365 = vmatpush2.msra.mxu0 0.0
    %366 = vmatprep.subr.mxu0 0.0
    %367 = vmatpush2.msra.mxu0 0.0
    %368 = vmatprep.subr.mxu0 0.0
    %369 = vmatpush2.msra.mxu0 0.0
    %370 = vmatprep.mubr.f32.mxu0 0.0
    %371 = vmatmul.mubr.f32.gmra.mxu0 %v304
    %v372 = vpop.f32.mrf.mxu0
    %v373 = vadd.f32 0.0, %v372
    %v374 = vpop.f32.mrf.mxu0
    %375 = vdwg.mxu0
    %v377 = vsel %vm302, %v286, 0
    %379 = vmatprep.subr.mxu0 0.0
    %380 = vmatpush1.msra.mxu0 0.0
    %381 = vmatprep.subr.mxu0 0.0
    %382 = vmatpush1.msra.mxu0 0.0
    %383 = vmatprep.subr.mxu0 0.0
    %384 = vmatpush1.msra.mxu0 0.0
    %385 = vmatprep.subr.mxu0 0.0
    %386 = vmatpush1.msra.mxu0 0.0
    %387 = vmatprep.subr.mxu0 0.0
    %388 = vmatpush1.msra.mxu0 0.0
    %389 = vmatprep.subr.mxu0 0.0
    %390 = vmatpush1.msra.mxu0 0.0
    %391 = vmatprep.subr.mxu0 0.0
    %392 = vmatpush1.msra.mxu0 0.0
    %393 = vmatprep.subr.mxu0 0.0
    %394 = vmatpush1.msra.mxu0 0.0
    %395 = vmatprep.subr.mxu0 0.0
    %396 = vmatpush1.msra.mxu0 0.0
    %397 = vmatprep.subr.mxu0 0.0
    %398 = vmatpush1.msra.mxu0 0.0
    %399 = vmatprep.subr.mxu0 0.0
    %400 = vmatpush1.msra.mxu0 0.0
    %401 = vmatprep.subr.mxu0 0.0
    %402 = vmatpush1.msra.mxu0 0.0
    %403 = vmatprep.subr.mxu0 0.0
    %404 = vmatpush1.msra.mxu0 0.0
    %405 = vmatprep.subr.mxu0 0.0
    %406 = vmatpush1.msra.mxu0 0.0
    %407 = vmatprep.subr.mxu0 0.0
    %408 = vmatpush1.msra.mxu0 %v149
    %409 = vmatprep.subr.mxu0 0.0
    %410 = vmatpush1.msra.mxu0 %v148
    %411 = vmatprep.subr.mxu0 0.0
    %412 = vmatpush2.msra.mxu0 0.0
    %413 = vmatprep.subr.mxu0 0.0
    %414 = vmatpush2.msra.mxu0 0.0
    %415 = vmatprep.subr.mxu0 0.0
    %416 = vmatpush2.msra.mxu0 0.0
    %417 = vmatprep.subr.mxu0 0.0
    %418 = vmatpush2.msra.mxu0 0.0
    %419 = vmatprep.subr.mxu0 0.0
    %420 = vmatpush2.msra.mxu0 0.0
    %421 = vmatprep.subr.mxu0 0.0
    %422 = vmatpush2.msra.mxu0 0.0
    %423 = vmatprep.subr.mxu0 0.0
    %424 = vmatpush2.msra.mxu0 0.0
    %425 = vmatprep.subr.mxu0 0.0
    %426 = vmatpush2.msra.mxu0 0.0
    %427 = vmatprep.subr.mxu0 0.0
    %428 = vmatpush2.msra.mxu0 0.0
    %429 = vmatprep.subr.mxu0 0.0
    %430 = vmatpush2.msra.mxu0 0.0
    %431 = vmatprep.subr.mxu0 0.0
    %432 = vmatpush2.msra.mxu0 0.0
    %433 = vmatprep.subr.mxu0 0.0
    %434 = vmatpush2.msra.mxu0 0.0
    %435 = vmatprep.subr.mxu0 0.0
    %436 = vmatpush2.msra.mxu0 0.0
    %437 = vmatprep.subr.mxu0 0.0
    %438 = vmatpush2.msra.mxu0 0.0
    %439 = vmatprep.subr.mxu0 0.0
    %440 = vmatpush2.msra.mxu0 0.0
    %441 = vmatprep.subr.mxu0 0.0
    %442 = vmatpush2.msra.mxu0 0.0
    %443 = vmatprep.mubr.f32.mxu0 0.0
    %444 = vmatmul.mubr.f32.gmra.mxu0 %v377
    %v445 = vpop.f32.mrf.mxu0
    %v446 = vadd.f32 0.0, %v445
    %v447 = vpop.f32.mrf.mxu0
    %448 = vdwg.mxu0
    %v449 = vmul.f32 %v373, %v236
    %v450 = vmul.f32 %v446, %v237
    %v451 = vsel %vm154, %v449, 0.0
    %v452 = vrot.slane %v451, 4
    %v453 = vadd.f32 %v451, %v452
    %v454 = vrot.slane %v453, 2
    %v455 = vadd.f32 %v453, %v454
    %v456 = vrot.slane %v455, 1
    %v457 = vadd.f32 %v455, %v456
    %v458 = vsel %vm154, %v450, 0.0
    %v459 = vrot.slane %v458, 4
    %v460 = vadd.f32 %v458, %v459
    %v461 = vrot.slane %v460, 2
    %v462 = vadd.f32 %v460, %v461
    %v463 = vrot.slane %v462, 1
    %v464 = vadd.f32 %v462, %v463
    %v465 = vlaneseq
    %v466 = vshrl.u32 %v465, 7
    %v467 = vsub.s32 0, %v466
    %v468 = vrot.slane %v43, %v467
    %vm471 = vcmask 1041409
    %v472 = vsel %vm471, %v464, %v457
    %v473 = vsel %vm154, %v472, 0
    %475 = vmatprep.subr.mxu0 0.0
    %476 = vmatpush1.msra.mxu0 0.0
    %477 = vmatprep.subr.mxu0 0.0
    %478 = vmatpush1.msra.mxu0 0.0
    %479 = vmatprep.subr.mxu0 0.0
    %480 = vmatpush1.msra.mxu0 0.0
    %481 = vmatprep.subr.mxu0 0.0
    %482 = vmatpush1.msra.mxu0 0.0
    %483 = vmatprep.subr.mxu0 0.0
    %484 = vmatpush1.msra.mxu0 0.0
    %485 = vmatprep.subr.mxu0 0.0
    %486 = vmatpush1.msra.mxu0 0.0
    %487 = vmatprep.subr.mxu0 0.0
    %488 = vmatpush1.msra.mxu0 0.0
    %489 = vmatprep.subr.mxu0 0.0
    %490 = vmatpush1.msra.mxu0 0.0
    %491 = vmatprep.subr.mxu0 0.0
    %492 = vmatpush1.msra.mxu0 0.0
    %493 = vmatprep.subr.mxu0 0.0
    %494 = vmatpush1.msra.mxu0 0.0
    %495 = vmatprep.subr.mxu0 0.0
    %496 = vmatpush1.msra.mxu0 0.0
    %497 = vmatprep.subr.mxu0 0.0
    %498 = vmatpush1.msra.mxu0 0.0
    %499 = vmatprep.subr.mxu0 0.0
    %500 = vmatpush1.msra.mxu0 %v40
    %501 = vmatprep.subr.mxu0 0.0
    %502 = vmatpush1.msra.mxu0 %v39
    %503 = vmatprep.subr.mxu0 0.0
    %504 = vmatpush1.msra.mxu0 %v38
    %505 = vmatprep.subr.mxu0 0.0
    %506 = vmatpush1.msra.mxu0 %v37
    %507 = vmatprep.subr.mxu0 0.0
    %508 = vmatpush2.msra.mxu0 0.0
    %509 = vmatprep.subr.mxu0 0.0
    %510 = vmatpush2.msra.mxu0 0.0
    %511 = vmatprep.subr.mxu0 0.0
    %512 = vmatpush2.msra.mxu0 0.0
    %513 = vmatprep.subr.mxu0 0.0
    %514 = vmatpush2.msra.mxu0 0.0
    %515 = vmatprep.subr.mxu0 0.0
    %516 = vmatpush2.msra.mxu0 0.0
    %517 = vmatprep.subr.mxu0 0.0
    %518 = vmatpush2.msra.mxu0 0.0
    %519 = vmatprep.subr.mxu0 0.0
    %520 = vmatpush2.msra.mxu0 0.0
    %521 = vmatprep.subr.mxu0 0.0
    %522 = vmatpush2.msra.mxu0 0.0
    %523 = vmatprep.subr.mxu0 0.0
    %524 = vmatpush2.msra.mxu0 0.0
    %525 = vmatprep.subr.mxu0 0.0
    %526 = vmatpush2.msra.mxu0 0.0
    %527 = vmatprep.subr.mxu0 0.0
    %528 = vmatpush2.msra.mxu0 0.0
    %529 = vmatprep.subr.mxu0 0.0
    %530 = vmatpush2.msra.mxu0 0.0
    %531 = vmatprep.subr.mxu0 0.0
    %532 = vmatpush2.msra.mxu0 0.0
    %533 = vmatprep.subr.mxu0 0.0
    %534 = vmatpush2.msra.mxu0 0.0
    %535 = vmatprep.subr.mxu0 0.0
    %536 = vmatpush2.msra.mxu0 0.0
    %537 = vmatprep.subr.mxu0 0.0
    %538 = vmatpush2.msra.mxu0 0.0
    %539 = vmatprep.mubr.f32.mxu0 0.0
    %540 = vmatmul.mubr.f32.gmra.mxu0 %v473
    %v541 = vpop.f32.mrf.mxu0
    %v542 = vadd.f32 %v468, %v541
    %v543 = vpop.f32.mrf.mxu0
    %544 = vdwg.mxu0
    %v547 = vunpack.c.l.s4 1966171168
    %v548 = vunpack.c.0.s8 %v547
    %v549 = vlaneseq
    %v550 = vshrl.u32 %v549, 7
    %v551 = vsub.s32 %v548, %v550
    %v552 = vrot.slane %v542, %v551
    %v553 = vcombine.high %v552, %v552
    %v555 = vunpack.c.l.s4 1966171168
    %v556 = vunpack.c.0.s8 %v555
    %v557 = vlaneseq
    %v558 = vshrl.u32 %v557, 7
    %v559 = vsub.s32 %v556, %v558
    %v560 = vrot.slane %v552, %v559
    %v562 = vunpack.c.l.s4 1966171168
    %v563 = vunpack.c.0.s8 %v562
    %v564 = vlaneseq
    %v565 = vshrl.u32 %v564, 7
    %v566 = vsub.s32 %v563, %v565
    %v567 = vrot.slane %v553, %v566
    %v568 = vlaneseq
    %v569 = vshrl.u32 %v568, 7
    %v570 = vsub.s32 0, %v569
    %v571 = vrot.slane %v560, %v570
    %v572 = vlaneseq
    %v573 = vshrl.u32 %v572, 7
    %v574 = vsub.s32 0, %v573
    %v575 = vrot.slane %v567, %v574
    %v578 = vadd.f32 %v22, %v571
    %v579 = vadd.f32 %v23, %v575
    %v580 = vld [vmem:[%s3 + $0x60] sm:$0xff]
    %v581 = vld [vmem:[%s3 + $0x68] sm:$0xff]
    %v582 = vld [vmem:[%s3 + $0x70] sm:$0xff]
    %v583 = vld [vmem:[%s3 + $0x78] sm:$0xff]
    %v584 = vld [vmem:[%s3 + $0x80] sm:$0xff]
    %v585 = vld [vmem:[%s3 + $0x88] sm:$0xff]
    %v586 = vld [vmem:[%s3 + $0x90] sm:$0xff]
    %v587 = vld [vmem:[%s3 + $0x98] sm:$0xff]
    %v588 = vld [vmem:[%s3 + $0xa0] sm:$0xff]
    %v589 = vld [vmem:[%s3 + $0xa8] sm:$0x1]
    %v590 = vld [vmem:[%s3 + $0xb0] sm:$0x1]
    %v591 = vld [vmem:[%s3 + $0xb8] sm:$0x1]
    %v592 = vlaneseq
    %v593 = vshrl.u32 %v592, 7
    %v594 = vsub.s32 0, %v593
    %v595 = vrot.slane %v589, %v594
    %596 = vmatprep.subr.mxu0 0.0
    %597 = vmatpush1.msra.mxu0 0.0
    %598 = vmatprep.subr.mxu0 0.0
    %599 = vmatpush1.msra.mxu0 0.0
    %600 = vmatprep.subr.mxu0 0.0
    %601 = vmatpush1.msra.mxu0 0.0
    %602 = vmatprep.subr.mxu0 0.0
    %603 = vmatpush1.msra.mxu0 0.0
    %604 = vmatprep.subr.mxu0 0.0
    %605 = vmatpush1.msra.mxu0 0.0
    %606 = vmatprep.subr.mxu0 0.0
    %607 = vmatpush1.msra.mxu0 0.0
    %608 = vmatprep.subr.mxu0 0.0
    %609 = vmatpush1.msra.mxu0 0.0
    %610 = vmatprep.subr.mxu0 0.0
    %611 = vmatpush1.msra.mxu0 0.0
    %612 = vmatprep.subr.mxu0 0.0
    %613 = vmatpush1.msra.mxu0 0.0
    %614 = vmatprep.subr.mxu0 0.0
    %615 = vmatpush1.msra.mxu0 0.0
    %616 = vmatprep.subr.mxu0 0.0
    %617 = vmatpush1.msra.mxu0 0.0
    %618 = vmatprep.subr.mxu0 0.0
    %619 = vmatpush1.msra.mxu0 0.0
    %620 = vmatprep.subr.mxu0 0.0
    %621 = vmatpush1.msra.mxu0 0.0
    %622 = vmatprep.subr.mxu0 0.0
    %623 = vmatpush1.msra.mxu0 0.0
    %624 = vmatprep.subr.mxu0 0.0
    %625 = vmatpush1.msra.mxu0 0.0
    %626 = vmatprep.subr.mxu0 0.0
    %627 = vmatpush1.msra.mxu0 %v580
    %628 = vmatprep.subr.mxu0 0.0
    %629 = vmatpush2.msra.mxu0 0.0
    %630 = vmatprep.subr.mxu0 0.0
    %631 = vmatpush2.msra.mxu0 0.0
    %632 = vmatprep.subr.mxu0 0.0
    %633 = vmatpush2.msra.mxu0 0.0
    %634 = vmatprep.subr.mxu0 0.0
    %635 = vmatpush2.msra.mxu0 0.0
    %636 = vmatprep.subr.mxu0 0.0
    %637 = vmatpush2.msra.mxu0 0.0
    %638 = vmatprep.subr.mxu0 0.0
    %639 = vmatpush2.msra.mxu0 0.0
    %640 = vmatprep.subr.mxu0 0.0
    %641 = vmatpush2.msra.mxu0 0.0
    %642 = vmatprep.subr.mxu0 0.0
    %643 = vmatpush2.msra.mxu0 0.0
    %644 = vmatprep.subr.mxu0 0.0
    %645 = vmatpush2.msra.mxu0 0.0
    %646 = vmatprep.subr.mxu0 0.0
    %647 = vmatpush2.msra.mxu0 0.0
    %648 = vmatprep.subr.mxu0 0.0
    %649 = vmatpush2.msra.mxu0 0.0
    %650 = vmatprep.subr.mxu0 0.0
    %651 = vmatpush2.msra.mxu0 0.0
    %652 = vmatprep.subr.mxu0 0.0
    %653 = vmatpush2.msra.mxu0 0.0
    %654 = vmatprep.subr.mxu0 0.0
    %655 = vmatpush2.msra.mxu0 0.0
    %656 = vmatprep.subr.mxu0 0.0
    %657 = vmatpush2.msra.mxu0 0.0
    %658 = vmatprep.subr.mxu0 0.0
    %659 = vmatpush2.msra.mxu0 0.0
    %660 = vmatprep.mubr.f32.mxu0 0.0
    %661 = vmatmul.mubr.f32.gmra.mxu0 %v50
    %v662 = vpop.f32.mrf.mxu0
    %v663 = vadd.f32 %v595, %v662
    %v664 = vpop.f32.mrf.mxu0
    %665 = vmatprep.mubr.f32.mxu0 0.0
    %666 = vmatmul.mubr.f32.gmra.mxu0 %v53
    %v667 = vpop.f32.mrf.mxu0
    %v668 = vadd.f32 %v595, %v667
    %v669 = vpop.f32.mrf.mxu0
    %670 = vmatprep.mubr.f32.mxu0 0.0
    %671 = vmatmul.mubr.f32.gmra.mxu0 %v56
    %v672 = vpop.f32.mrf.mxu0
    %v673 = vadd.f32 %v595, %v672
    %v674 = vpop.f32.mrf.mxu0
    %675 = vmatprep.mubr.f32.mxu0 0.0
    %676 = vmatmul.mubr.f32.gmra.mxu0 %v59
    %v677 = vpop.f32.mrf.mxu0
    %v678 = vadd.f32 %v595, %v677
    %v679 = vpop.f32.mrf.mxu0
    %680 = vdwg.mxu0
    %v681 = vmax.f32 %v663, 0.0
    %v682 = vmax.f32 %v668, 0.0
    %v683 = vmax.f32 %v673, 0.0
    %v684 = vmax.f32 %v678, 0.0
    %v685 = vlaneseq
    %v686 = vshrl.u32 %v685, 7
    %v687 = vsub.s32 0, %v686
    %v688 = vrot.slane %v590, %v687
    %v690 = vsel %vm154, %v578, 0
    %v693 = vsel %vm154, %v579, 0
    %695 = vmatprep.subr.mxu0 0.0
    %696 = vmatpush1.msra.mxu0 0.0
    %697 = vmatprep.subr.mxu0 0.0
    %698 = vmatpush1.msra.mxu0 0.0
    %699 = vmatprep.subr.mxu0 0.0
    %700 = vmatpush1.msra.mxu0 0.0
    %701 = vmatprep.subr.mxu0 0.0
    %702 = vmatpush1.msra.mxu0 0.0
    %703 = vmatprep.subr.mxu0 0.0
    %704 = vmatpush1.msra.mxu0 0.0
    %705 = vmatprep.subr.mxu0 0.0
    %706 = vmatpush1.msra.mxu0 0.0
    %707 = vmatprep.subr.mxu0 0.0
    %708 = vmatpush1.msra.mxu0 0.0
    %709 = vmatprep.subr.mxu0 0.0
    %710 = vmatpush1.msra.mxu0 0.0
    %711 = vmatprep.subr.mxu0 0.0
    %712 = vmatpush1.msra.mxu0 0.0
    %713 = vmatprep.subr.mxu0 0.0
    %714 = vmatpush1.msra.mxu0 0.0
    %715 = vmatprep.subr.mxu0 0.0
    %716 = vmatpush1.msra.mxu0 0.0
    %717 = vmatprep.subr.mxu0 0.0
    %718 = vmatpush1.msra.mxu0 0.0
    %719 = vmatprep.subr.mxu0 0.0
    %720 = vmatpush1.msra.mxu0 %v584
    %721 = vmatprep.subr.mxu0 0.0
    %722 = vmatpush1.msra.mxu0 %v583
    %723 = vmatprep.subr.mxu0 0.0
    %724 = vmatpush1.msra.mxu0 %v582
    %725 = vmatprep.subr.mxu0 0.0
    %726 = vmatpush1.msra.mxu0 %v581
    %727 = vmatprep.subr.mxu0 0.0
    %728 = vmatpush2.msra.mxu0 0.0
    %729 = vmatprep.subr.mxu0 0.0
    %730 = vmatpush2.msra.mxu0 0.0
    %731 = vmatprep.subr.mxu0 0.0
    %732 = vmatpush2.msra.mxu0 0.0
    %733 = vmatprep.subr.mxu0 0.0
    %734 = vmatpush2.msra.mxu0 0.0
    %735 = vmatprep.subr.mxu0 0.0
    %736 = vmatpush2.msra.mxu0 0.0
    %737 = vmatprep.subr.mxu0 0.0
    %738 = vmatpush2.msra.mxu0 0.0
    %739 = vmatprep.subr.mxu0 0.0
    %740 = vmatpush2.msra.mxu0 0.0
    %741 = vmatprep.subr.mxu0 0.0
    %742 = vmatpush2.msra.mxu0 0.0
    %743 = vmatprep.subr.mxu0 0.0
    %744 = vmatpush2.msra.mxu0 0.0
    %745 = vmatprep.subr.mxu0 0.0
    %746 = vmatpush2.msra.mxu0 0.0
    %747 = vmatprep.subr.mxu0 0.0
    %748 = vmatpush2.msra.mxu0 0.0
    %749 = vmatprep.subr.mxu0 0.0
    %750 = vmatpush2.msra.mxu0 0.0
    %751 = vmatprep.subr.mxu0 0.0
    %752 = vmatpush2.msra.mxu0 0.0
    %753 = vmatprep.subr.mxu0 0.0
    %754 = vmatpush2.msra.mxu0 0.0
    %755 = vmatprep.subr.mxu0 0.0
    %756 = vmatpush2.msra.mxu0 0.0
    %757 = vmatprep.subr.mxu0 0.0
    %758 = vmatpush2.msra.mxu0 0.0
    %759 = vmatprep.mubr.f32.mxu0 0.0
    %760 = vmatmul.mubr.f32.gmra.mxu0 %v690
    %v761 = vpop.f32.mrf.mxu0
    %v762 = vadd.f32 %v688, %v761
    %v763 = vpop.f32.mrf.mxu0
    %764 = vmatprep.mubr.f32.mxu0 0.0
    %765 = vmatmul.mubr.f32.gmra.mxu0 %v693
    %v766 = vpop.f32.mrf.mxu0
    %v767 = vadd.f32 %v688, %v766
    %v768 = vpop.f32.mrf.mxu0
    %769 = vdwg.mxu0
    %v770 = vmax.f32 %v762, 0.0
    %v771 = vmax.f32 %v767, 0.0
    %772 = vxpose.xlu0.b32.start [1/16] %v26, 128
    %773 = vxpose.xlu0.b32.cont [2/16] %v27, 128
    %774 = vxpose.xlu0.b32.cont [3/16] 0.0, 128
    %775 = vxpose.xlu0.b32.cont [4/16] 0.0, 128
    %776 = vxpose.xlu0.b32.cont [5/16] 0.0, 128
    %777 = vxpose.xlu0.b32.cont [6/16] 0.0, 128
    %778 = vxpose.xlu0.b32.cont [7/16] 0.0, 128
    %779 = vxpose.xlu0.b32.cont [8/16] 0.0, 128
    %780 = vxpose.xlu0.b32.cont [9/16] 0.0, 128
    %781 = vxpose.xlu0.b32.cont [10/16] 0.0, 128
    %782 = vxpose.xlu0.b32.cont [11/16] 0.0, 128
    %783 = vxpose.xlu0.b32.cont [12/16] 0.0, 128
    %784 = vxpose.xlu0.b32.cont [13/16] 0.0, 128
    %785 = vxpose.xlu0.b32.cont [14/16] 0.0, 128
    %786 = vxpose.xlu0.b32.cont [15/16] 0.0, 128
    %787 = vxpose.xlu0.b32.end [16/16] 0.0, 128
    %v788 = vpop.trf.xlu0
    %v789 = vpop.trf.xlu0
    %v790 = vpop.trf.xlu0
    %v791 = vpop.trf.xlu0
    %v792 = vpop.trf.xlu0
    %v793 = vpop.trf.xlu0
    %v794 = vpop.trf.xlu0
    %v795 = vpop.trf.xlu0
    %v796 = vpop.trf.xlu0
    %v797 = vpop.trf.xlu0
    %v798 = vpop.trf.xlu0
    %v799 = vpop.trf.xlu0
    %v800 = vpop.trf.xlu0
    %v801 = vpop.trf.xlu0
    %v802 = vpop.trf.xlu0
    %v803 = vpop.trf.xlu0
    %804 = vxpose.xlu0.b32.start [1/16] %v30, 128
    %805 = vxpose.xlu0.b32.cont [2/16] %v31, 128
    %806 = vxpose.xlu0.b32.cont [3/16] 0.0, 128
    %807 = vxpose.xlu0.b32.cont [4/16] 0.0, 128
    %808 = vxpose.xlu0.b32.cont [5/16] 0.0, 128
    %809 = vxpose.xlu0.b32.cont [6/16] 0.0, 128
    %810 = vxpose.xlu0.b32.cont [7/16] 0.0, 128
    %811 = vxpose.xlu0.b32.cont [8/16] 0.0, 128
    %812 = vxpose.xlu0.b32.cont [9/16] 0.0, 128
    %813 = vxpose.xlu0.b32.cont [10/16] 0.0, 128
    %814 = vxpose.xlu0.b32.cont [11/16] 0.0, 128
    %815 = vxpose.xlu0.b32.cont [12/16] 0.0, 128
    %816 = vxpose.xlu0.b32.cont [13/16] 0.0, 128
    %817 = vxpose.xlu0.b32.cont [14/16] 0.0, 128
    %818 = vxpose.xlu0.b32.cont [15/16] 0.0, 128
    %819 = vxpose.xlu0.b32.end [16/16] 0.0, 128
    %v820 = vpop.trf.xlu0
    %v821 = vpop.trf.xlu0
    %v822 = vpop.trf.xlu0
    %v823 = vpop.trf.xlu0
    %v824 = vpop.trf.xlu0
    %v825 = vpop.trf.xlu0
    %v826 = vpop.trf.xlu0
    %v827 = vpop.trf.xlu0
    %v828 = vpop.trf.xlu0
    %v829 = vpop.trf.xlu0
    %v830 = vpop.trf.xlu0
    %v831 = vpop.trf.xlu0
    %v832 = vpop.trf.xlu0
    %v833 = vpop.trf.xlu0
    %v834 = vpop.trf.xlu0
    %v835 = vpop.trf.xlu0
    %v837 = vsel %vm302, %v788, 0
    %839 = vmatprep.subr.mxu0 0.0
    %840 = vmatpush1.msra.mxu0 0.0
    %841 = vmatprep.subr.mxu0 0.0
    %842 = vmatpush1.msra.mxu0 0.0
    %843 = vmatprep.subr.mxu0 0.0
    %844 = vmatpush1.msra.mxu0 0.0
    %845 = vmatprep.subr.mxu0 0.0
    %846 = vmatpush1.msra.mxu0 0.0
    %847 = vmatprep.subr.mxu0 0.0
    %848 = vmatpush1.msra.mxu0 0.0
    %849 = vmatprep.subr.mxu0 0.0
    %850 = vmatpush1.msra.mxu0 0.0
    %851 = vmatprep.subr.mxu0 0.0
    %852 = vmatpush1.msra.mxu0 0.0
    %853 = vmatprep.subr.mxu0 0.0
    %854 = vmatpush1.msra.mxu0 0.0
    %855 = vmatprep.subr.mxu0 0.0
    %856 = vmatpush1.msra.mxu0 0.0
    %857 = vmatprep.subr.mxu0 0.0
    %858 = vmatpush1.msra.mxu0 0.0
    %859 = vmatprep.subr.mxu0 0.0
    %860 = vmatpush1.msra.mxu0 0.0
    %861 = vmatprep.subr.mxu0 0.0
    %862 = vmatpush1.msra.mxu0 0.0
    %863 = vmatprep.subr.mxu0 0.0
    %864 = vmatpush1.msra.mxu0 0.0
    %865 = vmatprep.subr.mxu0 0.0
    %866 = vmatpush1.msra.mxu0 0.0
    %867 = vmatprep.subr.mxu0 0.0
    %868 = vmatpush1.msra.mxu0 %v682
    %869 = vmatprep.subr.mxu0 0.0
    %870 = vmatpush1.msra.mxu0 %v681
    %871 = vmatprep.subr.mxu0 0.0
    %872 = vmatpush2.msra.mxu0 0.0
    %873 = vmatprep.subr.mxu0 0.0
    %874 = vmatpush2.msra.mxu0 0.0
    %875 = vmatprep.subr.mxu0 0.0
    %876 = vmatpush2.msra.mxu0 0.0
    %877 = vmatprep.subr.mxu0 0.0
    %878 = vmatpush2.msra.mxu0 0.0
    %879 = vmatprep.subr.mxu0 0.0
    %880 = vmatpush2.msra.mxu0 0.0
    %881 = vmatprep.subr.mxu0 0.0
    %882 = vmatpush2.msra.mxu0 0.0
    %883 = vmatprep.subr.mxu0 0.0
    %884 = vmatpush2.msra.mxu0 0.0
    %885 = vmatprep.subr.mxu0 0.0
    %886 = vmatpush2.msra.mxu0 0.0
    %887 = vmatprep.subr.mxu0 0.0
    %888 = vmatpush2.msra.mxu0 0.0
    %889 = vmatprep.subr.mxu0 0.0
    %890 = vmatpush2.msra.mxu0 0.0
    %891 = vmatprep.subr.mxu0 0.0
    %892 = vmatpush2.msra.mxu0 0.0
    %893 = vmatprep.subr.mxu0 0.0
    %894 = vmatpush2.msra.mxu0 0.0
    %895 = vmatprep.subr.mxu0 0.0
    %896 = vmatpush2.msra.mxu0 0.0
    %897 = vmatprep.subr.mxu0 0.0
    %898 = vmatpush2.msra.mxu0 0.0
    %899 = vmatprep.subr.mxu0 0.0
    %900 = vmatpush2.msra.mxu0 0.0
    %901 = vmatprep.subr.mxu0 0.0
    %902 = vmatpush2.msra.mxu0 0.0
    %903 = vmatprep.mubr.f32.mxu0 0.0
    %904 = vmatmul.mubr.f32.gmra.mxu0 %v837
    %v905 = vpop.f32.mrf.mxu0
    %v906 = vadd.f32 0.0, %v905
    %v907 = vpop.f32.mrf.mxu0
    %908 = vdwg.mxu0
    %v910 = vsel %vm302, %v820, 0
    %912 = vmatprep.subr.mxu0 0.0
    %913 = vmatpush1.msra.mxu0 0.0
    %914 = vmatprep.subr.mxu0 0.0
    %915 = vmatpush1.msra.mxu0 0.0
    %916 = vmatprep.subr.mxu0 0.0
    %917 = vmatpush1.msra.mxu0 0.0
    %918 = vmatprep.subr.mxu0 0.0
    %919 = vmatpush1.msra.mxu0 0.0
    %920 = vmatprep.subr.mxu0 0.0
    %921 = vmatpush1.msra.mxu0 0.0
    %922 = vmatprep.subr.mxu0 0.0
    %923 = vmatpush1.msra.mxu0 0.0
    %924 = vmatprep.subr.mxu0 0.0
    %925 = vmatpush1.msra.mxu0 0.0
    %926 = vmatprep.subr.mxu0 0.0
    %927 = vmatpush1.msra.mxu0 0.0
    %928 = vmatprep.subr.mxu0 0.0
    %929 = vmatpush1.msra.mxu0 0.0
    %930 = vmatprep.subr.mxu0 0.0
    %931 = vmatpush1.msra.mxu0 0.0
    %932 = vmatprep.subr.mxu0 0.0
    %933 = vmatpush1.msra.mxu0 0.0
    %934 = vmatprep.subr.mxu0 0.0
    %935 = vmatpush1.msra.mxu0 0.0
    %936 = vmatprep.subr.mxu0 0.0
    %937 = vmatpush1.msra.mxu0 0.0
    %938 = vmatprep.subr.mxu0 0.0
    %939 = vmatpush1.msra.mxu0 0.0
    %940 = vmatprep.subr.mxu0 0.0
    %941 = vmatpush1.msra.mxu0 %v684
    %942 = vmatprep.subr.mxu0 0.0
    %943 = vmatpush1.msra.mxu0 %v683
    %944 = vmatprep.subr.mxu0 0.0
    %945 = vmatpush2.msra.mxu0 0.0
    %946 = vmatprep.subr.mxu0 0.0
    %947 = vmatpush2.msra.mxu0 0.0
    %948 = vmatprep.subr.mxu0 0.0
    %949 = vmatpush2.msra.mxu0 0.0
    %950 = vmatprep.subr.mxu0 0.0
    %951 = vmatpush2.msra.mxu0 0.0
    %952 = vmatprep.subr.mxu0 0.0
    %953 = vmatpush2.msra.mxu0 0.0
    %954 = vmatprep.subr.mxu0 0.0
    %955 = vmatpush2.msra.mxu0 0.0
    %956 = vmatprep.subr.mxu0 0.0
    %957 = vmatpush2.msra.mxu0 0.0
    %958 = vmatprep.subr.mxu0 0.0
    %959 = vmatpush2.msra.mxu0 0.0
    %960 = vmatprep.subr.mxu0 0.0
    %961 = vmatpush2.msra.mxu0 0.0
    %962 = vmatprep.subr.mxu0 0.0
    %963 = vmatpush2.msra.mxu0 0.0
    %964 = vmatprep.subr.mxu0 0.0
    %965 = vmatpush2.msra.mxu0 0.0
    %966 = vmatprep.subr.mxu0 0.0
    %967 = vmatpush2.msra.mxu0 0.0
    %968 = vmatprep.subr.mxu0 0.0
    %969 = vmatpush2.msra.mxu0 0.0
    %970 = vmatprep.subr.mxu0 0.0
    %971 = vmatpush2.msra.mxu0 0.0
    %972 = vmatprep.subr.mxu0 0.0
    %973 = vmatpush2.msra.mxu0 0.0
    %974 = vmatprep.subr.mxu0 0.0
    %975 = vmatpush2.msra.mxu0 0.0
    %976 = vmatprep.mubr.f32.mxu0 0.0
    %977 = vmatmul.mubr.f32.gmra.mxu0 %v910
    %v978 = vpop.f32.mrf.mxu0
    %v979 = vadd.f32 0.0, %v978
    %v980 = vpop.f32.mrf.mxu0
    %981 = vdwg.mxu0
    %v982 = vmul.f32 %v906, %v770
    %v983 = vmul.f32 %v979, %v771
    %v984 = vsel %vm154, %v982, 0.0
    %v985 = vrot.slane %v984, 4
    %v986 = vadd.f32 %v984, %v985
    %v987 = vrot.slane %v986, 2
    %v988 = vadd.f32 %v986, %v987
    %v989 = vrot.slane %v988, 1
    %v990 = vadd.f32 %v988, %v989
    %v991 = vsel %vm154, %v983, 0.0
    %v992 = vrot.slane %v991, 4
    %v993 = vadd.f32 %v991, %v992
    %v994 = vrot.slane %v993, 2
    %v995 = vadd.f32 %v993, %v994
    %v996 = vrot.slane %v995, 1
    %v997 = vadd.f32 %v995, %v996
    %v998 = vlaneseq
    %v999 = vshrl.u32 %v998, 7
    %v1000 = vsub.s32 0, %v999
    %v1001 = vrot.slane %v591, %v1000
    %v1004 = vsel %vm471, %v997, %v990
    %v1005 = vsel %vm154, %v1004, 0
    %1007 = vmatprep.subr.mxu0 0.0
    %1008 = vmatpush1.msra.mxu0 0.0
    %1009 = vmatprep.subr.mxu0 0.0
    %1010 = vmatpush1.msra.mxu0 0.0
    %1011 = vmatprep.subr.mxu0 0.0
    %1012 = vmatpush1.msra.mxu0 0.0
    %1013 = vmatprep.subr.mxu0 0.0
    %1014 = vmatpush1.msra.mxu0 0.0
    %1015 = vmatprep.subr.mxu0 0.0
    %1016 = vmatpush1.msra.mxu0 0.0
    %1017 = vmatprep.subr.mxu0 0.0
    %1018 = vmatpush1.msra.mxu0 0.0
    %1019 = vmatprep.subr.mxu0 0.0
    %1020 = vmatpush1.msra.mxu0 0.0
    %1021 = vmatprep.subr.mxu0 0.0
    %1022 = vmatpush1.msra.mxu0 0.0
    %1023 = vmatprep.subr.mxu0 0.0
    %1024 = vmatpush1.msra.mxu0 0.0
    %1025 = vmatprep.subr.mxu0 0.0
    %1026 = vmatpush1.msra.mxu0 0.0
    %1027 = vmatprep.subr.mxu0 0.0
    %1028 = vmatpush1.msra.mxu0 0.0
    %1029 = vmatprep.subr.mxu0 0.0
    %1030 = vmatpush1.msra.mxu0 0.0
    %1031 = vmatprep.subr.mxu0 0.0
    %1032 = vmatpush1.msra.mxu0 %v588
    %1033 = vmatprep.subr.mxu0 0.0
    %1034 = vmatpush1.msra.mxu0 %v587
    %1035 = vmatprep.subr.mxu0 0.0
    %1036 = vmatpush1.msra.mxu0 %v586
    %1037 = vmatprep.subr.mxu0 0.0
    %1038 = vmatpush1.msra.mxu0 %v585
    %1039 = vmatprep.subr.mxu0 0.0
    %1040 = vmatpush2.msra.mxu0 0.0
    %1041 = vmatprep.subr.mxu0 0.0
    %1042 = vmatpush2.msra.mxu0 0.0
    %1043 = vmatprep.subr.mxu0 0.0
    %1044 = vmatpush2.msra.mxu0 0.0
    %1045 = vmatprep.subr.mxu0 0.0
    %1046 = vmatpush2.msra.mxu0 0.0
    %1047 = vmatprep.subr.mxu0 0.0
    %1048 = vmatpush2.msra.mxu0 0.0
    %1049 = vmatprep.subr.mxu0 0.0
    %1050 = vmatpush2.msra.mxu0 0.0
    %1051 = vmatprep.subr.mxu0 0.0
    %1052 = vmatpush2.msra.mxu0 0.0
    %1053 = vmatprep.subr.mxu0 0.0
    %1054 = vmatpush2.msra.mxu0 0.0
    %1055 = vmatprep.subr.mxu0 0.0
    %1056 = vmatpush2.msra.mxu0 0.0
    %1057 = vmatprep.subr.mxu0 0.0
    %1058 = vmatpush2.msra.mxu0 0.0
    %1059 = vmatprep.subr.mxu0 0.0
    %1060 = vmatpush2.msra.mxu0 0.0
    %1061 = vmatprep.subr.mxu0 0.0
    %1062 = vmatpush2.msra.mxu0 0.0
    %1063 = vmatprep.subr.mxu0 0.0
    %1064 = vmatpush2.msra.mxu0 0.0
    %1065 = vmatprep.subr.mxu0 0.0
    %1066 = vmatpush2.msra.mxu0 0.0
    %1067 = vmatprep.subr.mxu0 0.0
    %1068 = vmatpush2.msra.mxu0 0.0
    %1069 = vmatprep.subr.mxu0 0.0
    %1070 = vmatpush2.msra.mxu0 0.0
    %1071 = vmatprep.mubr.f32.mxu0 0.0
    %1072 = vmatmul.mubr.f32.gmra.mxu0 %v1005
    %v1073 = vpop.f32.mrf.mxu0
    %v1074 = vadd.f32 %v1001, %v1073
    %v1075 = vpop.f32.mrf.mxu0
    %1076 = vdwg.mxu0
    %v1079 = vunpack.c.l.s4 1966171168
    %v1080 = vunpack.c.0.s8 %v1079
    %v1081 = vlaneseq
    %v1082 = vshrl.u32 %v1081, 7
    %v1083 = vsub.s32 %v1080, %v1082
    %v1084 = vrot.slane %v1074, %v1083
    %v1085 = vcombine.high %v1084, %v1084
    %v1087 = vunpack.c.l.s4 1966171168
    %v1088 = vunpack.c.0.s8 %v1087
    %v1089 = vlaneseq
    %v1090 = vshrl.u32 %v1089, 7
    %v1091 = vsub.s32 %v1088, %v1090
    %v1092 = vrot.slane %v1084, %v1091
    %v1094 = vunpack.c.l.s4 1966171168
    %v1095 = vunpack.c.0.s8 %v1094
    %v1096 = vlaneseq
    %v1097 = vshrl.u32 %v1096, 7
    %v1098 = vsub.s32 %v1095, %v1097
    %v1099 = vrot.slane %v1085, %v1098
    %v1100 = vlaneseq
    %v1101 = vshrl.u32 %v1100, 7
    %v1102 = vsub.s32 0, %v1101
    %v1103 = vrot.slane %v1092, %v1102
    %v1104 = vlaneseq
    %v1105 = vshrl.u32 %v1104, 7
    %v1106 = vsub.s32 0, %v1105
    %v1107 = vrot.slane %v1099, %v1106
    %v1110 = vadd.f32 %v578, %v1103
    %v1111 = vadd.f32 %v579, %v1107
    %v1112 = vsel %vm154, %v1110, 0.0
    %v1113 = vrot.slane %v1112, 4
    %v1114 = vadd.f32 %v1112, %v1113
    %v1115 = vrot.slane %v1114, 2
    %v1116 = vadd.f32 %v1114, %v1115
    %v1117 = vrot.slane %v1116, 1
    %v1118 = vadd.f32 %v1116, %v1117
    %v1119 = vsel %vm154, %v1111, 0.0
    %v1120 = vrot.slane %v1119, 4
    %v1121 = vadd.f32 %v1119, %v1120
    %v1122 = vrot.slane %v1121, 2
    %v1123 = vadd.f32 %v1121, %v1122
    %v1124 = vrot.slane %v1123, 1
    %v1125 = vadd.f32 %v1123, %v1124
    %1126 = vst [vmem:[#allocation2] sm:$0xff] 0.0
    %v1129 = vsel %vm471, %v1125, %v1118
    %vm1131 = vcmask 254976
    %1132 = vst.msk [vmem:[#allocation2] sm:$0x3] %vm1131, %v1129
    // Predicated region
    $region18: #{tpu_custom_call.1} parent=1 // pred_check
      _
    $region19: #{tpu_custom_call.1} parent=1 // pred_check_branch
      %1134 = sbr.rel (0) target = $region21
    $region20: #{tpu_custom_call.1} parent=1 // pred_region
      %s1136 = ssub.s32 128, 128
      %1137 = vsyncadd [#allocation3], %s1136
      %s1139 = sshll.u32 [#allocation2], 4
      %s1140 = int_to_ptr.vmem [resolvable:$true] %s1139
      %1142 = dma.vmem_to_hbm [thread:$0]  %s1140, 128, %s4, [#allocation3]
    $region21: #{tpu_custom_call.1} parent=1 // pred_fallthru
      _
    // Predicated region
    $region22: #{tpu_custom_call.1} parent=1 // pred_check
      _
    $region23: #{tpu_custom_call.1} parent=1 // pred_check_branch
      %1144 = sbr.rel (0) target = $region25
    $region24: #{tpu_custom_call.1} parent=1 // pred_region
      %1145 = dma.done [#allocation3], 128
    $region25: #{tpu_custom_call.1} parent=1 // pred_fallthru
      _
    %1146 = vsyncpa [#allocation3], 1

</llo_original>
